<compile_context>
chip_gen: v5e
topology: v5e:2x2
jax: 0.10.0
libtpu: 0.0.40
codegen_flags: <defaults>
</compile_context>

<pallas_src>
import functools

import jax
import jax.numpy as jnp
from jax.experimental import pallas as pl
from jax.experimental.pallas import tpu as pltpu


BN_EPS = 1e-5          # nn.BatchNorm1d default eps
LEAKY_SLOPE = 0.2      # nn.LeakyReLU(0.2)
LANES = 128


def _round_up(n, m):
    return ((n + m - 1) // m) * m


def _mlp_classify_kernel(x_ref, w1_ref, gamma_ref, beta_ref, w2_ref, b2_ref,
                         o_ref, sum_ref, ssq_ref, *, n_rows):
    phase = pl.program_id(0)
    tile = pl.program_id(1)

    @pl.when(jnp.logical_and(phase == 0, tile == 0))
    def _init():
        sum_ref[...] = jnp.zeros_like(sum_ref)
        ssq_ref[...] = jnp.zeros_like(ssq_ref)

    @pl.when(phase == 0)
    def _accumulate():
        # Hidden pre-activation for this batch tile (no b1: cancelled by BN).
        h = jnp.dot(x_ref[...], w1_ref[...], preferred_element_type=jnp.float32)
        # Batch-axis reductions routed through the (otherwise idle) MXU
        # instead of cross-sublane XLU reduces.
        ones = jnp.ones((1, h.shape[0]), jnp.float32)
        sum_ref[...] += jnp.dot(ones, h, preferred_element_type=jnp.float32)
        ssq_ref[...] += jnp.dot(ones, h * h, preferred_element_type=jnp.float32)

    @pl.when(phase == 1)
    def _apply():
        h = jnp.dot(x_ref[...], w1_ref[...], preferred_element_type=jnp.float32)
        inv_n = 1.0 / float(n_rows)                         # true batch size (static)
        mean = sum_ref[...] * inv_n                         # (1, hidden)
        var = jnp.maximum(ssq_ref[...] * inv_n - mean * mean, 0.0)
        inv_std = jax.lax.rsqrt(var + BN_EPS)
        # Fused BN affine: one multiply-add over the (TILE_B, hidden) tile.
        scale = gamma_ref[...] * inv_std                    # (1, hidden)
        shift = beta_ref[...] - mean * scale                # (1, hidden)
        hn = h * scale + shift
        # LeakyReLU(0.2): max(x, 0.2*x) is valid since 0 < slope < 1.
        act = jnp.maximum(hn, LEAKY_SLOPE * hn)
        out = jnp.dot(act, w2_ref[...], preferred_element_type=jnp.float32)
        o_ref[...] = (out + b2_ref[...]).astype(o_ref.dtype)


def mlp_classify_forward(x, params, tile_b=None):
    """x: (B, fea_dim) float32; params: dict of weights (see init_params)."""
    B, fea_dim = x.shape
    hidden = params["w1"].shape[1]
    out_dim = params["w2"].shape[1]

    # Batch tile: large enough to amortize per-grid-step overhead, small enough
    # to be VMEM-safe on v5e/v6e/v7x (<= 2048 rows; a few MiB total).
    if tile_b is None:
        tile_b = min(2048, _round_up(B, 8))
    tile_b = max(8, _round_up(tile_b, 8))
    b_pad = _round_up(B, tile_b)
    num_tiles = b_pad // tile_b

    # Zero-pad extra batch rows. Safe because the kernel has no b1, so padded
    # rows give h == 0 and contribute nothing to sum / sum-of-squares; the
    # batch statistics divide by the true B.
    if b_pad != B:
        x = jnp.pad(x, ((0, b_pad - B), (0, 0)))

    # Lane-pad the narrow output head to 128 lanes (unmasked vector stores).
    out_pad = _round_up(max(out_dim, LANES), LANES)
    w2p = jnp.pad(params["w2"], ((0, 0), (0, out_pad - out_dim)))
    b2p = jnp.pad(params["b2"], ((0, 0), (0, out_pad - out_dim)))

    kernel = functools.partial(_mlp_classify_kernel, n_rows=B)

    bytes_x = b_pad * fea_dim * 4
    bytes_out = b_pad * out_pad * 4
    bytes_w = (fea_dim * hidden + 2 * hidden + hidden * out_pad + out_pad) * 4
    cost = pl.CostEstimate(
        flops=(4 * b_pad * fea_dim * hidden          # x @ W1, both phases
               + 2 * b_pad * hidden * out_pad        # act @ W2
               + 10 * b_pad * hidden),               # elementwise / reductions
        transcendentals=hidden,                      # rsqrt on (1, hidden)
        bytes_accessed=2 * bytes_x + bytes_out + bytes_w,
    )

    # TODO(synk): for v7x megacore, the tile axis could be "parallel" with
    # per-core sum/sumsq accumulators combined via CMEM; kept "arbitrary" here
    # because the phase-0 accumulation must see all tiles.
    out = pl.pallas_call(
        kernel,
        out_shape=jax.ShapeDtypeStruct((b_pad, out_pad), jnp.float32),
        grid_spec=pltpu.PrefetchScalarGridSpec(
            num_scalar_prefetch=0,
            grid=(2, num_tiles),                      # (phase, batch tile)
            in_specs=[
                pl.BlockSpec((tile_b, fea_dim), lambda p, t: (t, 0)),   # x
                pl.BlockSpec((fea_dim, hidden), lambda p, t: (0, 0)),   # w1
                pl.BlockSpec((1, hidden), lambda p, t: (0, 0)),         # gamma
                pl.BlockSpec((1, hidden), lambda p, t: (0, 0)),         # beta
                pl.BlockSpec((hidden, out_pad), lambda p, t: (0, 0)),   # w2 (padded)
                pl.BlockSpec((1, out_pad), lambda p, t: (0, 0)),        # b2 (padded)
            ],
            # p * t keeps the output block index constant throughout phase 0,
            # so no un-written tile is ever flushed to HBM; phase 1 writes each
            # tile exactly once.
            out_specs=pl.BlockSpec((tile_b, out_pad), lambda p, t: (p * t, 0)),
            scratch_shapes=[
                pltpu.VMEM((1, hidden), jnp.float32),   # sum(h)   over batch
                pltpu.VMEM((1, hidden), jnp.float32),   # sum(h^2) over batch
            ],
        ),
        compiler_params=pltpu.CompilerParams(
            dimension_semantics=("arbitrary", "arbitrary"),
            vmem_limit_bytes=32 * 1024 * 1024,
        ),
        cost_estimate=cost,
    )(x, params["w1"], params["gamma"], params["beta"], w2p, b2p)

    return out[:B, :out_dim]


def init_params(key, fea_dim, hidden=32, output_dim=2):
    """Deterministic init mimicking PyTorch defaults:
       Linear: U(-1/sqrt(fan_in), 1/sqrt(fan_in)); BatchNorm: gamma=1, beta=0.
       b1 is kept for module parity but is mathematically cancelled by the
       training-mode BatchNorm, so the kernel never consumes it."""
    k1, k2, k3, k4 = jax.random.split(key, 4)
    bound1 = 1.0 / jnp.sqrt(fea_dim)
    bound2 = 1.0 / jnp.sqrt(hidden)
    params = {
        # stored as (in, out) = transpose of PyTorch's (out, in) weight
        "w1": jax.random.uniform(k1, (fea_dim, hidden), jnp.float32,
                                 -bound1, bound1),
        "b1": jax.random.uniform(k2, (1, hidden), jnp.float32,
                                 -bound1, bound1),
        "gamma": jnp.ones((1, hidden), jnp.float32),
        "beta": jnp.zeros((1, hidden), jnp.float32),
        "w2": jax.random.uniform(k3, (hidden, output_dim), jnp.float32,
                                 -bound2, bound2),
        "b2": jax.random.uniform(k4, (1, output_dim), jnp.float32,
                                 -bound2, bound2),
    }
    return params


if __name__ == "__main__":
    key = jax.random.PRNGKey(0)
    k_params, k_x = jax.random.split(key)

    batch = 10         # not a multiple of the tile -> exercises the padding path
    fea_dim = 16       # opt.fea_dim
    output_dim = 2

    params = init_params(k_params, fea_dim, hidden=32, output_dim=output_dim)
    x = jax.random.normal(k_x, (batch, fea_dim), jnp.float32)

    out = mlp_classify_forward(x, params)
    jax.block_until_ready(out)

    # Pure-JAX reference of the PyTorch module (including b1, which the kernel
    # omits because training-mode BatchNorm cancels it exactly).
    h = x @ params["w1"] + params["b1"]
    mean = h.mean(axis=0, keepdims=True)
    var = ((h - mean) ** 2).mean(axis=0, keepdims=True)
    hn = (h - mean) / jnp.sqrt(var + BN_EPS) * params["gamma"] + params["beta"]
    act = jnp.where(hn > 0, hn, LEAKY_SLOPE * hn)
    ref = act @ params["w2"] + params["b2"]

    assert out.shape == ref.shape, (out.shape, ref.shape)
    assert jnp.allclose(out, ref, atol=1e-4, rtol=1e-4), "mismatch vs reference"

    # TODO(synk): training-mode BN here uses batch stats only; running_mean /
    # running_var buffers of the PyTorch module are not updated (pure forward).

    print("KERNEL_OK")
</pallas_src>

<mosaic_0001>
module attributes {stable_mosaic.version = 11 : i64} {
  func.func @_mlp_classify_kernel(%arg0: i32, %arg1: i32, %arg2: memref<16x16xf32, #tpu.memory_space<vmem>>, %arg3: memref<16x32xf32, #tpu.memory_space<vmem>>, %arg4: memref<1x32xf32, #tpu.memory_space<vmem>>, %arg5: memref<1x32xf32, #tpu.memory_space<vmem>>, %arg6: memref<32x128xf32, #tpu.memory_space<vmem>>, %arg7: memref<1x128xf32, #tpu.memory_space<vmem>>, %arg8: memref<16x128xf32, #tpu.memory_space<vmem>>, %arg9: memref<1x32xf32, #tpu.memory_space<vmem>>, %arg10: memref<1x32xf32, #tpu.memory_space<vmem>>) attributes {dimension_semantics = [#tpu.dimension_semantics<arbitrary>, #tpu.dimension_semantics<arbitrary>], iteration_bounds = array<i64: 2, 1>, scalar_prefetch = 0 : i64, scratch_operands = 2 : i64, tpu.core_type = #tpu.core_type<tc>, window_params = [{transform_indices = @transform_0, window_bounds = array<i64: 16, 16>}, {pipeline_mode = #tpu.pipeline_mode<synchronous>, transform_indices = @transform_1, window_bounds = array<i64: 16, 32>}, {pipeline_mode = #tpu.pipeline_mode<synchronous>, transform_indices = @transform_2, window_bounds = array<i64: 1, 32>}, {pipeline_mode = #tpu.pipeline_mode<synchronous>, transform_indices = @transform_3, window_bounds = array<i64: 1, 32>}, {pipeline_mode = #tpu.pipeline_mode<synchronous>, transform_indices = @transform_4, window_bounds = array<i64: 32, 128>}, {pipeline_mode = #tpu.pipeline_mode<synchronous>, transform_indices = @transform_5, window_bounds = array<i64: 1, 128>}, {transform_indices = @transform_6, window_bounds = array<i64: 16, 128>}]} {
    %c0_i32 = arith.constant 0 : i32
    %0 = arith.cmpi eq, %arg0, %c0_i32 : i32
    %c0_i32_0 = arith.constant 0 : i32
    %1 = arith.cmpi eq, %arg1, %c0_i32_0 : i32
    %2 = arith.andi %0, %1 : i1
    %3 = arith.extui %2 : i1 to i32
    %c0_i32_1 = arith.constant 0 : i32
    %4 = arith.cmpi ne, %3, %c0_i32_1 : i32
    scf.if %4 {
      %cst = arith.constant 0.000000e+00 : f32
      %11 = vector.broadcast %cst : f32 to vector<1x32xf32>
      %c0 = arith.constant 0 : index
      %c0_5 = arith.constant 0 : index
      %12 = vector.load %arg9[%c0, %c0_5] : memref<1x32xf32, #tpu.memory_space<vmem>>, vector<1x32xf32>
      tpu.vector_store %arg9[%c0, %c0_5], %11 {strides = array<i32>} : memref<1x32xf32, #tpu.memory_space<vmem>>, vector<1x32xf32>,
      %cst_6 = arith.constant 0.000000e+00 : f32
      %13 = vector.broadcast %cst_6 : f32 to vector<1x32xf32>
      %c0_7 = arith.constant 0 : index
      %c0_8 = arith.constant 0 : index
      %14 = vector.load %arg10[%c0_7, %c0_8] : memref<1x32xf32, #tpu.memory_space<vmem>>, vector<1x32xf32>
      tpu.vector_store %arg10[%c0_7, %c0_8], %13 {strides = array<i32>} : memref<1x32xf32, #tpu.memory_space<vmem>>, vector<1x32xf32>,
    } else {
    }
    %c0_i32_2 = arith.constant 0 : i32
    %5 = arith.cmpi eq, %arg0, %c0_i32_2 : i32
    %6 = arith.extui %5 : i1 to i32
    %c0_i32_3 = arith.constant 0 : i32
    %7 = arith.cmpi ne, %6, %c0_i32_3 : i32
    scf.if %7 {
      %c0 = arith.constant 0 : index
      %c0_5 = arith.constant 0 : index
      %11 = vector.load %arg2[%c0, %c0_5] : memref<16x16xf32, #tpu.memory_space<vmem>>, vector<16x16xf32>
      %c0_6 = arith.constant 0 : index
      %c0_7 = arith.constant 0 : index
      %12 = vector.load %arg3[%c0_6, %c0_7] : memref<16x32xf32, #tpu.memory_space<vmem>>, vector<16x32xf32>
      %cst = arith.constant dense<0.000000e+00> : vector<16x32xf32>
      %13 = tpu.matmul %11, %12, %cst {dimension_numbers = #tpu.dot_dimension_numbers<[1], [0], [0], [1], [0, 0, 1, 1], [], []>} : vector<16x16xf32>, vector<16x32xf32>, vector<16x32xf32> -> vector<16x32xf32>
      %cst_8 = arith.constant 1.000000e+00 : f32
      %14 = vector.broadcast %cst_8 : f32 to vector<1x16xf32>
      %c0_9 = arith.constant 0 : index
      %c0_10 = arith.constant 0 : index
      %15 = vector.load %arg9[%c0_9, %c0_10] : memref<1x32xf32, #tpu.memory_space<vmem>>, vector<1x32xf32>
      %cst_11 = arith.constant dense<0.000000e+00> : vector<1x32xf32>
      %16 = tpu.matmul %14, %13, %cst_11 {dimension_numbers = #tpu.dot_dimension_numbers<[1], [0], [0], [1], [0, 0, 1, 1], [], []>} : vector<1x16xf32>, vector<16x32xf32>, vector<1x32xf32> -> vector<1x32xf32>
      %17 = arith.addf %15, %16 : vector<1x32xf32>
      %c0_12 = arith.constant 0 : index
      %c0_13 = arith.constant 0 : index
      %18 = vector.load %arg9[%c0_12, %c0_13] : memref<1x32xf32, #tpu.memory_space<vmem>>, vector<1x32xf32>
      tpu.vector_store %arg9[%c0_12, %c0_13], %17 {strides = array<i32>} : memref<1x32xf32, #tpu.memory_space<vmem>>, vector<1x32xf32>,
      %c0_14 = arith.constant 0 : index
      %c0_15 = arith.constant 0 : index
      %19 = vector.load %arg10[%c0_14, %c0_15] : memref<1x32xf32, #tpu.memory_space<vmem>>, vector<1x32xf32>
      %20 = arith.mulf %13, %13 : vector<16x32xf32>
      %cst_16 = arith.constant dense<0.000000e+00> : vector<1x32xf32>
      %21 = tpu.matmul %14, %20, %cst_16 {dimension_numbers = #tpu.dot_dimension_numbers<[1], [0], [0], [1], [0, 0, 1, 1], [], []>} : vector<1x16xf32>, vector<16x32xf32>, vector<1x32xf32> -> vector<1x32xf32>
      %22 = arith.addf %19, %21 : vector<1x32xf32>
      %c0_17 = arith.constant 0 : index
      %c0_18 = arith.constant 0 : index
      %23 = vector.load %arg10[%c0_17, %c0_18] : memref<1x32xf32, #tpu.memory_space<vmem>>, vector<1x32xf32>
      tpu.vector_store %arg10[%c0_17, %c0_18], %22 {strides = array<i32>} : memref<1x32xf32, #tpu.memory_space<vmem>>, vector<1x32xf32>,
    } else {
    }
    %c1_i32 = arith.constant 1 : i32
    %8 = arith.cmpi eq, %arg0, %c1_i32 : i32
    %9 = arith.extui %8 : i1 to i32
    %c0_i32_4 = arith.constant 0 : i32
    %10 = arith.cmpi ne, %9, %c0_i32_4 : i32
    scf.if %10 {
      %c0 = arith.constant 0 : index
      %c0_5 = arith.constant 0 : index
      %11 = vector.load %arg2[%c0, %c0_5] : memref<16x16xf32, #tpu.memory_space<vmem>>, vector<16x16xf32>
      %c0_6 = arith.constant 0 : index
      %c0_7 = arith.constant 0 : index
      %12 = vector.load %arg3[%c0_6, %c0_7] : memref<16x32xf32, #tpu.memory_space<vmem>>, vector<16x32xf32>
      %cst = arith.constant dense<0.000000e+00> : vector<16x32xf32>
      %13 = tpu.matmul %11, %12, %cst {dimension_numbers = #tpu.dot_dimension_numbers<[1], [0], [0], [1], [0, 0, 1, 1], [], []>} : vector<16x16xf32>, vector<16x32xf32>, vector<16x32xf32> -> vector<16x32xf32>
      %c0_8 = arith.constant 0 : index
      %c0_9 = arith.constant 0 : index
      %14 = vector.load %arg9[%c0_8, %c0_9] : memref<1x32xf32, #tpu.memory_space<vmem>>, vector<1x32xf32>
      %cst_10 = arith.constant 1.000000e-01 : f32
      %15 = vector.broadcast %cst_10 : f32 to vector<1x32xf32>
      %16 = arith.mulf %14, %15 : vector<1x32xf32>
      %c0_11 = arith.constant 0 : index
      %c0_12 = arith.constant 0 : index
      %17 = vector.load %arg10[%c0_11, %c0_12] : memref<1x32xf32, #tpu.memory_space<vmem>>, vector<1x32xf32>
      %cst_13 = arith.constant 1.000000e-01 : f32
      %18 = vector.broadcast %cst_13 : f32 to vector<1x32xf32>
      %19 = arith.mulf %17, %18 : vector<1x32xf32>
      %20 = arith.mulf %16, %16 : vector<1x32xf32>
      %21 = arith.subf %19, %20 : vector<1x32xf32>
      %cst_14 = arith.constant 0.000000e+00 : f32
      %22 = vector.broadcast %cst_14 : f32 to vector<1x32xf32>
      %23 = arith.maximumf %21, %22 : vector<1x32xf32>
      %cst_15 = arith.constant 9.99999974E-6 : f32
      %24 = vector.broadcast %cst_15 : f32 to vector<1x32xf32>
      %25 = arith.addf %23, %24 : vector<1x32xf32>
      %26 = math.rsqrt %25 : vector<1x32xf32>
      %c0_16 = arith.constant 0 : index
      %c0_17 = arith.constant 0 : index
      %27 = vector.load %arg4[%c0_16, %c0_17] : memref<1x32xf32, #tpu.memory_space<vmem>>, vector<1x32xf32>
      %28 = arith.mulf %27, %26 : vector<1x32xf32>
      %c0_18 = arith.constant 0 : index
      %c0_19 = arith.constant 0 : index
      %29 = vector.load %arg5[%c0_18, %c0_19] : memref<1x32xf32, #tpu.memory_space<vmem>>, vector<1x32xf32>
      %30 = arith.mulf %16, %28 : vector<1x32xf32>
      %31 = arith.subf %29, %30 : vector<1x32xf32>
      %32 = vector.broadcast %28 : vector<1x32xf32> to vector<16x32xf32>
      %33 = arith.mulf %13, %32 : vector<16x32xf32>
      %34 = vector.broadcast %31 : vector<1x32xf32> to vector<16x32xf32>
      %35 = arith.addf %33, %34 : vector<16x32xf32>
      %cst_20 = arith.constant 2.000000e-01 : f32
      %36 = vector.broadcast %cst_20 : f32 to vector<16x32xf32>
      %37 = arith.mulf %36, %35 : vector<16x32xf32>
      %38 = arith.maximumf %35, %37 : vector<16x32xf32>
      %c0_21 = arith.constant 0 : index
      %c0_22 = arith.constant 0 : index
      %39 = vector.load %arg6[%c0_21, %c0_22] : memref<32x128xf32, #tpu.memory_space<vmem>>, vector<32x128xf32>
      %cst_23 = arith.constant dense<0.000000e+00> : vector<16x128xf32>
      %40 = tpu.matmul %38, %39, %cst_23 {dimension_numbers = #tpu.dot_dimension_numbers<[1], [0], [0], [1], [0, 0, 1, 1], [], []>} : vector<16x32xf32>, vector<32x128xf32>, vector<16x128xf32> -> vector<16x128xf32>
      %c0_24 = arith.constant 0 : index
      %c0_25 = arith.constant 0 : index
      %41 = vector.load %arg7[%c0_24, %c0_25] : memref<1x128xf32, #tpu.memory_space<vmem>>, vector<1x128xf32>
      %42 = vector.broadcast %41 : vector<1x128xf32> to vector<16x128xf32>
      %43 = arith.addf %40, %42 : vector<16x128xf32>
      %c0_26 = arith.constant 0 : index
      %c0_27 = arith.constant 0 : index
      %44 = vector.load %arg8[%c0_26, %c0_27] : memref<16x128xf32, #tpu.memory_space<vmem>>, vector<16x128xf32>
      tpu.vector_store %arg8[%c0_26, %c0_27], %43 {strides = array<i32>} : memref<16x128xf32, #tpu.memory_space<vmem>>, vector<16x128xf32>,
    } else {
    }
    return
  }
  func.func @transform_0(%arg0: i32, %arg1: i32) -> (i32, i32) {
    %c0_i32 = arith.constant 0 : i32
    %c0_i32_0 = arith.constant 0 : i32
    return %arg1, %c0_i32 : i32, i32
  }
  func.func @transform_1(%arg0: i32, %arg1: i32) -> (i32, i32) {
    %c0_i32 = arith.constant 0 : i32
    %c0_i32_0 = arith.constant 0 : i32
    %c0_i32_1 = arith.constant 0 : i32
    return %c0_i32, %c0_i32_0 : i32, i32
  }
  func.func @transform_2(%arg0: i32, %arg1: i32) -> (i32, i32) {
    %c0_i32 = arith.constant 0 : i32
    %c0_i32_0 = arith.constant 0 : i32
    %c0_i32_1 = arith.constant 0 : i32
    return %c0_i32, %c0_i32_0 : i32, i32
  }
  func.func @transform_3(%arg0: i32, %arg1: i32) -> (i32, i32) {
    %c0_i32 = arith.constant 0 : i32
    %c0_i32_0 = arith.constant 0 : i32
    %c0_i32_1 = arith.constant 0 : i32
    return %c0_i32, %c0_i32_0 : i32, i32
  }
  func.func @transform_4(%arg0: i32, %arg1: i32) -> (i32, i32) {
    %c0_i32 = arith.constant 0 : i32
    %c0_i32_0 = arith.constant 0 : i32
    %c0_i32_1 = arith.constant 0 : i32
    return %c0_i32, %c0_i32_0 : i32, i32
  }
  func.func @transform_5(%arg0: i32, %arg1: i32) -> (i32, i32) {
    %c0_i32 = arith.constant 0 : i32
    %c0_i32_0 = arith.constant 0 : i32
    %c0_i32_1 = arith.constant 0 : i32
    return %c0_i32, %c0_i32_0 : i32, i32
  }
  func.func @transform_6(%arg0: i32, %arg1: i32) -> (i32, i32) {
    %0 = arith.muli %arg0, %arg1 : i32
    %c0_i32 = arith.constant 0 : i32
    %c0_i32_0 = arith.constant 0 : i32
    return %0, %c0_i32 : i32, i32
  }
}

</mosaic_0001>

<llo_original>
// kernel: tpu_custom_call.1
$region0: #{tpu_custom_call.1}
  #allocation0 [shape = 'u32[]', space=smem, size = 0x4, offset = 0x4, fixed_abs, tag = 'smem constant byte address 0x4 - core index']
  #allocation1 [shape = 'u32[72,128]{1,0:T(1,128)}', space=vmem, size = 0x9000, scoped, tag = 'internal scratch']
  #allocation2 [shape = 'f32[1,32]{1,0:T(1,128)}', space=vmem, size = 0x200, scoped, tag = 'scratch operand']
  #allocation3 [shape = 'f32[1,32]{1,0:T(1,128)}', space=vmem, size = 0x200, scoped, tag = 'scratch operand']
  %s0 = inlined_call_operand.hbm [shape: f32[16,16], index: 0, kind: input, shape index: {}]
  %s1 = inlined_call_operand.hbm [shape: f32[16,32], index: 1, kind: input, shape index: {}]
  %s2 = inlined_call_operand.vmem [shape: f32[1,32], index: 2, kind: input, shape index: {}]
  %s3 = inlined_call_operand.vmem [shape: f32[1,32], index: 3, kind: input, shape index: {}]
  %s4 = inlined_call_operand.hbm [shape: f32[32,128], index: 4, kind: input, shape index: {}]
  %s5 = inlined_call_operand.vmem [shape: f32[1,128], index: 5, kind: input, shape index: {}]
  %s6 = inlined_call_operand.hbm [shape: f32[16,128], index: 6, kind: output, shape index: {}]
  %s7 = sld [smem:[#allocation0]]
  $region81: #{tpu_custom_call.1} parent=0
    _
  %s9 = ssub.s32 1, %s7
  %s10 = scalar_select 0, %s9, %s7
  $region1: #{tpu_custom_call.1} parent=0
    #allocation4 [shape = 'u8[8192]{0}', space=vmem, size = 0x2000, scoped, tag = 'input window, operand 0, single buffered']
    #allocation5 [shape = 's32[2]{0}', space=sflag, size = 0x8, scoped, tag = 'scoped memory for tpu_custom_call.1']
    #allocation6 [shape = 's32[2]{0}', space=sflag, size = 0x8, scoped, tag = 'scoped memory for tpu_custom_call.1']
    #allocation7 [shape = 'u8[8192]{0}', space=vmem, size = 0x2000, scoped, tag = 'input window, operand 1, single buffered']
    #allocation8 [shape = 's32[1]{0}', space=sflag, size = 0x4, scoped, tag = 'scoped memory for tpu_custom_call.1']
    #allocation9 [shape = 'u8[16384]{0}', space=vmem, size = 0x4000, scoped, tag = 'input window, operand 4, single buffered']
    #allocation10 [shape = 'u8[16384]{0}', space=vmem, size = 0x4000, scoped, tag = 'output window, operand 0']
    %11 = vsyncpa [#allocation5], 0
    %12 = vsyncpa [#allocation8], 0
    %13 = vsyncpa [#allocation6], 0
    %s14 = scalar_lea.sflag [#allocation6], 1
    %15 = vsyncpa %s14, 0
    loop: start=0, step=1, limit=4
    $region2: #{tpu_custom_call.1} parent=1 // loop_pre_header
      _
    $region3: #{tpu_custom_call.1} parent=1 // loop_header
      %s17 = sphi 0, %s21
      %p18 = scmp.ge.s32.totalorder %s17, 4
      %s24 = sphi 0, %s36
      %s25 = sphi 0, %s32
      %s26 = sphi 0, %s24
      %s27 = sphi 0, %s25
      %s28 = sphi 0, %s26
      %s29 = sphi 0, %s27
      %s39 = sphi 0, %s41
      %s42 = sphi 0, %s39
      %s43 = sphi 0, %s42
      %s59 = sphi 0, %s43
      %s63 = sphi 0, %s63
      %s65 = sphi 0, %s63
      %s66 = sphi 0, %s65
      %s80 = sphi 0, %s66
      %s84 = sphi 0, %s84
      %s86 = sphi 0, %s84
      %s87 = sphi 0, %s86
      %s101 = sphi 0, %s87
      %s105 = sphi 0, %s105
      %s107 = sphi 0, %s105
      %s108 = sphi 0, %s107
      %s122 = sphi 0, %s108
      %s126 = sphi 0, %s126
      %s128 = sphi 0, %s126
      %s129 = sphi 0, %s128
      %s143 = sphi 0, %s129
      %s147 = sphi 0, %s147
      %s149 = sphi 0, %s147
      %s150 = sphi 0, %s149
      %s164 = sphi 0, %s150
      %s172 = sphi 0, %s174
      %s175 = sphi 0, %s172
      %s176 = sphi 0, %s175
      %s192 = sphi 0, %s176
    $region4: #{tpu_custom_call.1} parent=1 // loop_header_branch
      %20 = sbr.rel (%p18) target = $region8
    $region5: #{tpu_custom_call.1} parent=1 // loop_body
      %s22 = ssub.s32 %s17, 1
      %s23 = ssub.s32 %s17, 2
      %s30 = sadd.s32 1, %s25
      %p31 = scmp.ge.s32.totalorder %s30, 1
      %s32 = scalar_select %p31, 0, %s30
      %s33 = sadd.s32 1, %s24
      %s34 = scalar_select %p31, %s33, %s24
      %p35 = scmp.ge.s32.totalorder %s34, 2
      %s36 = scalar_select %p35, 0, %s34
      %s37 = ssub.s32 %s25, %s32
      %p38 = scmp.eq.s32.totalorder %s37, 0
      %s40 = sadd.s32 %s39, 1
      %s41 = scalar_select %p38, %s39, %s40
      %p44 = pneg %p38
      %p45 = scmp.eq.s32.totalorder %s17, 1
      %p46 = por %p44, %p45
      %p47 = scmp.ne.s32.totalorder %s39, %s42
      %p48 = scmp.eq.s32.totalorder %s17, 0
      %p49 = por %p47, %p48
      %p50 = scmp.ne.s32.totalorder %s39, %s42
      %p51 = scmp.eq.s32.totalorder %s22, 1
      %p52 = por %p50, %p51
      %p53 = scmp.ne.s32.totalorder %s42, %s43
      %p54 = scmp.eq.s32.totalorder %s22, 0
      %p55 = por %p53, %p54
      %p56 = scmp.ne.s32.totalorder %s42, %s43
      %p57 = scmp.eq.s32.totalorder %s23, 1
      %p58 = por %p56, %p57
      %p60 = scmp.ne.s32.totalorder %s43, %s59
      %p61 = scmp.eq.s32.totalorder %s23, 0
      %p62 = por %p60, %p61
      %s64 = sadd.s32 %s63, 1
      %p67 = scmp.eq.s32.totalorder %s17, 1
      %p68 = scmp.ne.s32.totalorder %s63, %s65
      %p69 = scmp.eq.s32.totalorder %s17, 0
      %p70 = por %p68, %p69
      %p71 = scmp.ne.s32.totalorder %s63, %s65
      %p72 = scmp.eq.s32.totalorder %s22, 1
      %p73 = por %p71, %p72
      %p74 = scmp.ne.s32.totalorder %s65, %s66
      %p75 = scmp.eq.s32.totalorder %s22, 0
      %p76 = por %p74, %p75
      %p77 = scmp.ne.s32.totalorder %s65, %s66
      %p78 = scmp.eq.s32.totalorder %s23, 1
      %p79 = por %p77, %p78
      %p81 = scmp.ne.s32.totalorder %s66, %s80
      %p82 = scmp.eq.s32.totalorder %s23, 0
      %p83 = por %p81, %p82
      %s85 = sadd.s32 %s84, 1
      %p88 = scmp.eq.s32.totalorder %s17, 1
      %p89 = scmp.ne.s32.totalorder %s84, %s86
      %p90 = scmp.eq.s32.totalorder %s17, 0
      %p91 = por %p89, %p90
      %p92 = scmp.ne.s32.totalorder %s84, %s86
      %p93 = scmp.eq.s32.totalorder %s22, 1
      %p94 = por %p92, %p93
      %p95 = scmp.ne.s32.totalorder %s86, %s87
      %p96 = scmp.eq.s32.totalorder %s22, 0
      %p97 = por %p95, %p96
      %p98 = scmp.ne.s32.totalorder %s86, %s87
      %p99 = scmp.eq.s32.totalorder %s23, 1
      %p100 = por %p98, %p99
      %p102 = scmp.ne.s32.totalorder %s87, %s101
      %p103 = scmp.eq.s32.totalorder %s23, 0
      %p104 = por %p102, %p103
      %s106 = sadd.s32 %s105, 1
      %p109 = scmp.eq.s32.totalorder %s17, 1
      %p110 = scmp.ne.s32.totalorder %s105, %s107
      %p111 = scmp.eq.s32.totalorder %s17, 0
      %p112 = por %p110, %p111
      %p113 = scmp.ne.s32.totalorder %s105, %s107
      %p114 = scmp.eq.s32.totalorder %s22, 1
      %p115 = por %p113, %p114
      %p116 = scmp.ne.s32.totalorder %s107, %s108
      %p117 = scmp.eq.s32.totalorder %s22, 0
      %p118 = por %p116, %p117
      %p119 = scmp.ne.s32.totalorder %s107, %s108
      %p120 = scmp.eq.s32.totalorder %s23, 1
      %p121 = por %p119, %p120
      %p123 = scmp.ne.s32.totalorder %s108, %s122
      %p124 = scmp.eq.s32.totalorder %s23, 0
      %p125 = por %p123, %p124
      %s127 = sadd.s32 %s126, 1
      %p130 = scmp.eq.s32.totalorder %s17, 1
      %p131 = scmp.ne.s32.totalorder %s126, %s128
      %p132 = scmp.eq.s32.totalorder %s17, 0
      %p133 = por %p131, %p132
      %p134 = scmp.ne.s32.totalorder %s126, %s128
      %p135 = scmp.eq.s32.totalorder %s22, 1
      %p136 = por %p134, %p135
      %p137 = scmp.ne.s32.totalorder %s128, %s129
      %p138 = scmp.eq.s32.totalorder %s22, 0
      %p139 = por %p137, %p138
      %p140 = scmp.ne.s32.totalorder %s128, %s129
      %p141 = scmp.eq.s32.totalorder %s23, 1
      %p142 = por %p140, %p141
      %p144 = scmp.ne.s32.totalorder %s129, %s143
      %p145 = scmp.eq.s32.totalorder %s23, 0
      %p146 = por %p144, %p145
      %s148 = sadd.s32 %s147, 1
      %p151 = scmp.eq.s32.totalorder %s17, 1
      %p152 = scmp.ne.s32.totalorder %s147, %s149
      %p153 = scmp.eq.s32.totalorder %s17, 0
      %p154 = por %p152, %p153
      %p155 = scmp.ne.s32.totalorder %s147, %s149
      %p156 = scmp.eq.s32.totalorder %s22, 1
      %p157 = por %p155, %p156
      %p158 = scmp.ne.s32.totalorder %s149, %s150
      %p159 = scmp.eq.s32.totalorder %s22, 0
      %p160 = por %p158, %p159
      %p161 = scmp.ne.s32.totalorder %s149, %s150
      %p162 = scmp.eq.s32.totalorder %s23, 1
      %p163 = por %p161, %p162
      %p165 = scmp.ne.s32.totalorder %s150, %s164
      %p166 = scmp.eq.s32.totalorder %s23, 0
      %p167 = por %p165, %p166
      %s168 = smul.u32 %s24, %s25
      %s169 = smul.u32 %s36, %s32
      %s170 = ssub.s32 %s168, %s169
      %p171 = scmp.eq.s32.totalorder %s170, 0
      %s173 = sadd.s32 %s172, 1
      %s174 = scalar_select %p171, %s172, %s173
      %p177 = pneg %p171
      %p178 = scmp.eq.s32.totalorder %s17, 1
      %p179 = por %p177, %p178
      %p180 = scmp.ne.s32.totalorder %s172, %s175
      %p181 = scmp.eq.s32.totalorder %s17, 0
      %p182 = por %p180, %p181
      %p183 = scmp.ne.s32.totalorder %s172, %s175
      %p184 = scmp.eq.s32.totalorder %s22, 1
      %p185 = por %p183, %p184
      %p186 = scmp.ne.s32.totalorder %s175, %s176
      %p187 = scmp.eq.s32.totalorder %s22, 0
      %p188 = por %p186, %p187
      %p189 = scmp.ne.s32.totalorder %s175, %s176
      %p190 = scmp.eq.s32.totalorder %s23, 1
      %p191 = por %p189, %p190
      %p193 = scmp.ne.s32.totalorder %s176, %s192
      %p194 = scmp.eq.s32.totalorder %s23, 0
      %p195 = por %p193, %p194
      %p196 = scmp.le.s32.totalorder 1, %s17
      %p197 = scmp.lt.s32.totalorder %s17, 3
      %p198 = pnand %p196, %p197
      %p199 = pneg %p198
      // Predicated region
      $region9: #{tpu_custom_call.1} parent=5 // pred_check
        _
      $region10: #{tpu_custom_call.1} parent=5 // pred_check_branch
        %201 = sbr.rel (%p198) target = $region12
      $region11: #{tpu_custom_call.1} parent=5 // pred_region
        %s202 = ssub.s32 %s17, 1
        // Predicated region
        $region13: #{tpu_custom_call.1} parent=11 // pred_check
          %p203 = pneg %p55
        $region14: #{tpu_custom_call.1} parent=11 // pred_check_branch
          %205 = sbr.rel (%p203) target = $region16
        $region15: #{tpu_custom_call.1} parent=11 // pred_region
          %s206 = smul.u32 2, %s27
          %208 = vsyncadd [#allocation5], 0
          %s209 = smul.addr %s206, 8
          %s210 = scalar_lea.hbm %s0, %s209
          %s211 = sshll.u32 %s210, 4
          %s212 = int_to_ptr.hbm [resolvable:$true] %s211
          %s213 = sshll.u32 [#allocation4], 4
          %s214 = int_to_ptr.vmem [resolvable:$true] %s213
          %219 = dma.hbm_to_vmem [thread:$0]  %s212, 256, %s214, [#allocation5], 128, 128, 8
        $region16: #{tpu_custom_call.1} parent=11 // pred_fallthru
          _
        // Predicated region
        $region17: #{tpu_custom_call.1} parent=11 // pred_check
          %p220 = pneg %p76
        $region18: #{tpu_custom_call.1} parent=11 // pred_check_branch
          %222 = sbr.rel (%p220) target = $region20
        $region19: #{tpu_custom_call.1} parent=11 // pred_region
          %224 = vsyncadd [#allocation8], 0
          %s225 = sshll.u32 %s1, 4
          %s226 = int_to_ptr.hbm [resolvable:$true] %s225
          %s227 = sshll.u32 [#allocation7], 4
          %s228 = int_to_ptr.vmem [resolvable:$true] %s227
          %233 = dma.hbm_to_vmem [thread:$0]  %s226, 256, %s228, [#allocation8], 128, 128, 8
        $region20: #{tpu_custom_call.1} parent=11 // pred_fallthru
          _
        // Predicated region
        $region21: #{tpu_custom_call.1} parent=11 // pred_check
          %p234 = pneg %p97
        $region22: #{tpu_custom_call.1} parent=11 // pred_check_branch
          %236 = sbr.rel (%p234) target = $region24
        $region23: #{tpu_custom_call.1} parent=11 // pred_region
          _
        $region24: #{tpu_custom_call.1} parent=11 // pred_fallthru
          _
        // Predicated region
        $region25: #{tpu_custom_call.1} parent=11 // pred_check
          %p237 = pneg %p118
        $region26: #{tpu_custom_call.1} parent=11 // pred_check_branch
          %239 = sbr.rel (%p237) target = $region28
        $region27: #{tpu_custom_call.1} parent=11 // pred_region
          _
        $region28: #{tpu_custom_call.1} parent=11 // pred_fallthru
          _
        // Predicated region
        $region29: #{tpu_custom_call.1} parent=11 // pred_check
          %p240 = pneg %p139
        $region30: #{tpu_custom_call.1} parent=11 // pred_check_branch
          %242 = sbr.rel (%p240) target = $region32
        $region31: #{tpu_custom_call.1} parent=11 // pred_region
          %244 = vsyncadd [#allocation8], 0
          %s245 = sshll.u32 %s4, 4
          %s246 = int_to_ptr.hbm [resolvable:$true] %s245
          %s247 = sshll.u32 [#allocation9], 4
          %s248 = int_to_ptr.vmem [resolvable:$true] %s247
          %253 = dma.hbm_to_vmem [thread:$0]  %s246, 512, %s248, [#allocation8], 128, 128, 8
        $region32: #{tpu_custom_call.1} parent=11 // pred_fallthru
          _
        // Predicated region
        $region33: #{tpu_custom_call.1} parent=11 // pred_check
          %p254 = pneg %p160
        $region34: #{tpu_custom_call.1} parent=11 // pred_check_branch
          %256 = sbr.rel (%p254) target = $region36
        $region35: #{tpu_custom_call.1} parent=11 // pred_region
          _
        $region36: #{tpu_custom_call.1} parent=11 // pred_fallthru
          _
      $region12: #{tpu_custom_call.1} parent=5 // pred_fallthru
        _
      %p257 = scmp.lt.s32.totalorder %s17, 2
      // Predicated region
      $region37: #{tpu_custom_call.1} parent=5 // pred_check
        %p258 = pneg %p257
      $region38: #{tpu_custom_call.1} parent=5 // pred_check_branch
        %260 = sbr.rel (%p258) target = $region40
      $region39: #{tpu_custom_call.1} parent=5 // pred_region
        _
      $region40: #{tpu_custom_call.1} parent=5 // pred_fallthru
        _
      %p261 = scmp.le.s32.totalorder 1, %s17
      %p262 = scmp.lt.s32.totalorder %s17, 3
      %p263 = pnand %p261, %p262
      %p264 = pneg %p263
      // Predicated region
      $region41: #{tpu_custom_call.1} parent=5 // pred_check
        _
      $region42: #{tpu_custom_call.1} parent=5 // pred_check_branch
        %266 = sbr.rel (%p263) target = $region44
      $region43: #{tpu_custom_call.1} parent=5 // pred_region
        %s267 = ssub.s32 %s17, 1
        // Predicated region
        $region45: #{tpu_custom_call.1} parent=43 // pred_check
          %p268 = pneg %p55
        $region46: #{tpu_custom_call.1} parent=43 // pred_check_branch
          %270 = sbr.rel (%p268) target = $region48
        $region47: #{tpu_custom_call.1} parent=43 // pred_region
          %272 = dma.done [#allocation5], 256
        $region48: #{tpu_custom_call.1} parent=43 // pred_fallthru
          _
        // Predicated region
        $region49: #{tpu_custom_call.1} parent=43 // pred_check
          %p273 = pneg %p76
        $region50: #{tpu_custom_call.1} parent=43 // pred_check_branch
          %275 = sbr.rel (%p273) target = $region52
        $region51: #{tpu_custom_call.1} parent=43 // pred_region
          %277 = dma.done [#allocation8], 256
        $region52: #{tpu_custom_call.1} parent=43 // pred_fallthru
          _
        // Predicated region
        $region53: #{tpu_custom_call.1} parent=43 // pred_check
          %p278 = pneg %p139
        $region54: #{tpu_custom_call.1} parent=43 // pred_check_branch
          %280 = sbr.rel (%p278) target = $region56
        $region55: #{tpu_custom_call.1} parent=43 // pred_region
          %282 = dma.done [#allocation8], 512
        $region56: #{tpu_custom_call.1} parent=43 // pred_fallthru
          _
        %p283 = pneg %p55
        %p284 = pneg %p52
        %p285 = pneg %p76
        %p286 = pneg %p73
        %p287 = pneg %p97
        %p288 = pneg %p94
        %p289 = pneg %p118
        %p290 = pneg %p115
        %p291 = pneg %p139
        %p292 = pneg %p136
        %p293 = pneg %p160
        %p294 = pneg %p157
        %p295 = pneg %p188
        %p296 = pneg %p185
        %s297 = sand.u32 %s175, 1
        %s298 = scalar_lea.sflag [#allocation6], %s297
        %s299 = sand.u32 %s175, 1
        %s300 = smul.addr %s299, 16
        %s301 = scalar_lea.vmem [#allocation10], %s300
        %s302 = smul.u32 2, %s27
        %s303 = smul.u32 %s26, %s27
        %s304 = smul.u32 2, %s303
        %p305 = scmp.eq.s32.totalorder %s26, 0
        %p306 = scmp.eq.s32.totalorder %s27, 0
        %p307 = pnand %p305, %p306
        %p308 = pneg %p307
        // Predicated region
        $region57: #{tpu_custom_call.1} parent=43 // pred_check
          _
        $region58: #{tpu_custom_call.1} parent=43 // pred_check_branch
          %310 = sbr.rel (%p307) target = $region60
        $region59: #{tpu_custom_call.1} parent=43 // pred_region
          %vm311 = vcmask 253952
          %312 = vst.msk [vmem:[#allocation2] sm:$0x1] %vm311, 0.0
          %313 = vst.msk [vmem:[#allocation3] sm:$0x1] %vm311, 0.0
        $region60: #{tpu_custom_call.1} parent=43 // pred_fallthru
          _
        // Predicated region
        $region61: #{tpu_custom_call.1} parent=43 // pred_check
          %p314 = pneg %p305
        $region62: #{tpu_custom_call.1} parent=43 // pred_check_branch
          %316 = sbr.rel (%p314) target = $region64
        $region63: #{tpu_custom_call.1} parent=43 // pred_region
          %v317 = vld [vmem:[#allocation4] sm:$0xff]
          %v318 = vld [vmem:[#allocation4 + $0x8] sm:$0xff]
          %v319 = vld [vmem:[#allocation7] sm:$0xff]
          %v320 = vld [vmem:[#allocation7 + $0x8] sm:$0xff]
          %vm321 = vcmask 130048
          %v323 = vsel %vm321, %v317, 0
          %v326 = vsel %vm321, %v318, 0
          %328 = vmatpush.msra.mxu0 0.0
          %329 = vmatpush.msra.mxu0 0.0
          %330 = vmatpush.msra.mxu0 0.0
          %331 = vmatpush.msra.mxu0 0.0
          %332 = vmatpush.msra.mxu0 0.0
          %333 = vmatpush.msra.mxu0 0.0
          %334 = vmatpush.msra.mxu0 0.0
          %335 = vmatpush.msra.mxu0 0.0
          %336 = vmatpush.msra.mxu0 0.0
          %337 = vmatpush.msra.mxu0 0.0
          %338 = vmatpush.msra.mxu0 0.0
          %339 = vmatpush.msra.mxu0 0.0
          %340 = vmatpush.msra.mxu0 0.0
          %341 = vmatpush.msra.mxu0 0.0
          %342 = vmatpush.msra.mxu0 %v320
          %343 = vmatpush.msra.mxu0 %v319
          %344 = vmatmul.f32.gmra.mxu0 %v323
          %v345 = vpop.f32.mrf.mxu0
          %v346 = vadd.f32 0.0, %v345
          %347 = vmatmul.f32.gmra.mxu0 %v326
          %v348 = vpop.f32.mrf.mxu0
          %v349 = vadd.f32 0.0, %v348
          %350 = vdwg.mxu0
          %v351 = vld [vmem:[#allocation2] sm:$0x1]
          %v353 = vsel %vm321, 1.0, 0
          %355 = vmatpush.msra.mxu0 0.0
          %356 = vmatpush.msra.mxu0 0.0
          %357 = vmatpush.msra.mxu0 0.0
          %358 = vmatpush.msra.mxu0 0.0
          %359 = vmatpush.msra.mxu0 0.0
          %360 = vmatpush.msra.mxu0 0.0
          %361 = vmatpush.msra.mxu0 0.0
          %362 = vmatpush.msra.mxu0 0.0
          %363 = vmatpush.msra.mxu0 0.0
          %364 = vmatpush.msra.mxu0 0.0
          %365 = vmatpush.msra.mxu0 0.0
          %366 = vmatpush.msra.mxu0 0.0
          %367 = vmatpush.msra.mxu0 0.0
          %368 = vmatpush.msra.mxu0 0.0
          %369 = vmatpush.msra.mxu0 %v349
          %370 = vmatpush.msra.mxu0 %v346
          %371 = vmatmul.f32.gmra.mxu0 %v353
          %v372 = vpop.f32.mrf.mxu0
          %v373 = vadd.f32 0.0, %v372
          %374 = vdwg.mxu0
          %v375 = vadd.f32 %v351, %v373
          %vm376 = vcmask 253952
          %377 = vst.msk [vmem:[#allocation2] sm:$0x1] %vm376, %v375
          %v378 = vld [vmem:[#allocation3] sm:$0x1]
          %v379 = vmul.f32 %v346, %v346
          %v380 = vmul.f32 %v349, %v349
          %381 = vmatpush.msra.mxu0 0.0
          %382 = vmatpush.msra.mxu0 0.0
          %383 = vmatpush.msra.mxu0 0.0
          %384 = vmatpush.msra.mxu0 0.0
          %385 = vmatpush.msra.mxu0 0.0
          %386 = vmatpush.msra.mxu0 0.0
          %387 = vmatpush.msra.mxu0 0.0
          %388 = vmatpush.msra.mxu0 0.0
          %389 = vmatpush.msra.mxu0 0.0
          %390 = vmatpush.msra.mxu0 0.0
          %391 = vmatpush.msra.mxu0 0.0
          %392 = vmatpush.msra.mxu0 0.0
          %393 = vmatpush.msra.mxu0 0.0
          %394 = vmatpush.msra.mxu0 0.0
          %395 = vmatpush.msra.mxu0 %v380
          %396 = vmatpush.msra.mxu0 %v379
          %397 = vmatmul.f32.gmra.mxu0 %v353
          %v398 = vpop.f32.mrf.mxu0
          %v399 = vadd.f32 0.0, %v398
          %400 = vdwg.mxu0
          %v401 = vadd.f32 %v378, %v399
          %402 = vst.msk [vmem:[#allocation3] sm:$0x1] %vm376, %v401
        $region64: #{tpu_custom_call.1} parent=43 // pred_fallthru
          _
        %p403 = scmp.eq.s32.totalorder %s26, 1
        // Predicated region
        $region65: #{tpu_custom_call.1} parent=43 // pred_check
          %p404 = pneg %p403
        $region66: #{tpu_custom_call.1} parent=43 // pred_check_branch
          %406 = sbr.rel (%p404) target = $region68
        $region67: #{tpu_custom_call.1} parent=43 // pred_region
          %v407 = vld [vmem:[#allocation4] sm:$0xff]
          %v408 = vld [vmem:[#allocation4 + $0x8] sm:$0xff]
          %v409 = vld [vmem:[#allocation7] sm:$0xff]
          %v410 = vld [vmem:[#allocation7 + $0x8] sm:$0xff]
          %vm411 = vcmask 130048
          %v413 = vsel %vm411, %v407, 0
          %v416 = vsel %vm411, %v408, 0
          %418 = vmatpush.msra.mxu0 0.0
          %419 = vmatpush.msra.mxu0 0.0
          %420 = vmatpush.msra.mxu0 0.0
          %421 = vmatpush.msra.mxu0 0.0
          %422 = vmatpush.msra.mxu0 0.0
          %423 = vmatpush.msra.mxu0 0.0
          %424 = vmatpush.msra.mxu0 0.0
          %425 = vmatpush.msra.mxu0 0.0
          %426 = vmatpush.msra.mxu0 0.0
          %427 = vmatpush.msra.mxu0 0.0
          %428 = vmatpush.msra.mxu0 0.0
          %429 = vmatpush.msra.mxu0 0.0
          %430 = vmatpush.msra.mxu0 0.0
          %431 = vmatpush.msra.mxu0 0.0
          %432 = vmatpush.msra.mxu0 %v410
          %433 = vmatpush.msra.mxu0 %v409
          %434 = vmatmul.f32.gmra.mxu0 %v413
          %v435 = vpop.f32.mrf.mxu0
          %v436 = vadd.f32 0.0, %v435
          %437 = vmatmul.f32.gmra.mxu0 %v416
          %v438 = vpop.f32.mrf.mxu0
          %v439 = vadd.f32 0.0, %v438
          %440 = vdwg.mxu0
          %v441 = vld [vmem:[#allocation2] sm:$0x1]
          %v442 = vmul.f32 %v441, 0.1
          %v443 = vld [vmem:[#allocation3] sm:$0x1]
          %v444 = vmul.f32 %v443, 0.1
          %v445 = vmul.f32 %v442, %v442
          %v446 = vsub.f32 %v444, %v445
          %v447 = vmax.f32 %v446, 0.0
          %v448 = vadd.f32 %v447, 1e-05
          %v449 = vrsqrt.pop %v448
          %v450 = vmul.f32 %v449, %v448
          %v451 = vmul.f32 %v450, %v449
          %v452 = vmul.f32 0.5, %v451
          %v453 = vsub.f32 1.5, %v452
          %v454 = vmul.f32 %v449, %v453
          %vm455 = vweird.f32 %v448
          %vm456 = vweird.f32 %v449
          %vm457 = vmor %vm455, %vm456
          %v458 = vsel %vm457, %v449, %v454
          %v459 = vld [vmem:[%s2] sm:$0x1]
          %v460 = vmul.f32 %v459, %v458
          %v461 = vld [vmem:[%s3] sm:$0x1]
          %v462 = vmul.f32 %v442, %v460
          %v463 = vsub.f32 %v461, %v462
          %v465 = vperm.slane %v460, 0
          %v467 = vmul.f32 %v436, %v465
          %v468 = vmul.f32 %v439, %v465
          %v470 = vperm.slane %v463, 0
          %v472 = vadd.f32 %v467, %v470
          %v473 = vadd.f32 %v468, %v470
          %v474 = vmul.f32 %v472, 0.2
          %v475 = vmul.f32 %v473, 0.2
          %v476 = vmax.f32 %v472, %v474
          %v477 = vmax.f32 %v473, %v475
          %v478 = vld [vmem:[#allocation9] sm:$0xff]
          %v479 = vld [vmem:[#allocation9 + $0x8] sm:$0xff]
          %v480 = vld [vmem:[#allocation9 + $0x10] sm:$0xff]
          %v481 = vld [vmem:[#allocation9 + $0x18] sm:$0xff]
          %v482 = vld [vmem:[%s5] sm:$0x1]
          %v484 = vperm.slane %v482, 0
          %vm486 = vcmask 261120
          %v488 = vsel %vm486, %v476, 0
          %v491 = vsel %vm486, %v477, 0
          %493 = vmatpush.msra.mxu0 0.0
          %494 = vmatpush.msra.mxu0 0.0
          %495 = vmatpush.msra.mxu0 0.0
          %496 = vmatpush.msra.mxu0 0.0
          %497 = vmatpush.msra.mxu0 0.0
          %498 = vmatpush.msra.mxu0 0.0
          %499 = vmatpush.msra.mxu0 0.0
          %500 = vmatpush.msra.mxu0 0.0
          %501 = vmatpush.msra.mxu0 0.0
          %502 = vmatpush.msra.mxu0 0.0
          %503 = vmatpush.msra.mxu0 0.0
          %504 = vmatpush.msra.mxu0 0.0
          %505 = vmatpush.msra.mxu0 %v481
          %506 = vmatpush.msra.mxu0 %v480
          %507 = vmatpush.msra.mxu0 %v479
          %508 = vmatpush.msra.mxu0 %v478
          %509 = vmatmul.f32.gmra.mxu0 %v488
          %v510 = vpop.f32.mrf.mxu0
          %v511 = vadd.f32 %v484, %v510
          %512 = vmatmul.f32.gmra.mxu0 %v491
          %v513 = vpop.f32.mrf.mxu0
          %v514 = vadd.f32 %v484, %v513
          %515 = vdwg.mxu0
          %516 = vst [vmem:[%s301] sm:$0xff] %v511
          %517 = vst [vmem:[%s301 + $0x8] sm:$0xff] %v514
        $region68: #{tpu_custom_call.1} parent=43 // pred_fallthru
          _
        %s518 = sand.u32 %s175, 1
        %s519 = scalar_lea.sflag [#allocation6], %s518
        %s520 = sand.u32 %s175, 1
        %s521 = smul.addr %s520, 16
        %s522 = scalar_lea.vmem [#allocation10], %s521
        // Predicated region
        $region69: #{tpu_custom_call.1} parent=43 // pred_check
          %p523 = pneg %p185
        $region70: #{tpu_custom_call.1} parent=43 // pred_check_branch
          %525 = sbr.rel (%p523) target = $region72
        $region71: #{tpu_custom_call.1} parent=43 // pred_region
          %s526 = smul.u32 %s26, %s27
          %s527 = smul.u32 2, %s526
          %529 = vsyncadd %s519, 0
          %s530 = smul.addr %s527, 8
          %s531 = scalar_lea.hbm %s6, %s530
          %s532 = sshll.u32 %s522, 4
          %s533 = int_to_ptr.vmem [resolvable:$true] %s532
          %s534 = sshll.u32 %s531, 4
          %s535 = int_to_ptr.hbm [resolvable:$true] %s534
          %540 = dma.vmem_to_hbm [thread:$0]  %s533, 256, %s535, %s519, 128, 128, 8
        $region72: #{tpu_custom_call.1} parent=43 // pred_fallthru
          _
      $region44: #{tpu_custom_call.1} parent=5 // pred_fallthru
        _
      %p541 = scmp.le.s32.totalorder 2, %s17
      // Predicated region
      $region73: #{tpu_custom_call.1} parent=5 // pred_check
        %p542 = pneg %p541
      $region74: #{tpu_custom_call.1} parent=5 // pred_check_branch
        %544 = sbr.rel (%p542) target = $region76
      $region75: #{tpu_custom_call.1} parent=5 // pred_region
        %s545 = ssub.s32 %s17, 2
        // Predicated region
        $region77: #{tpu_custom_call.1} parent=75 // pred_check
          %p546 = pneg %p191
        $region78: #{tpu_custom_call.1} parent=75 // pred_check_branch
          %548 = sbr.rel (%p546) target = $region80
        $region79: #{tpu_custom_call.1} parent=75 // pred_region
          %s549 = sand.u32 %s176, 1
          %s550 = scalar_lea.sflag [#allocation6], %s549
          %s551 = sand.u32 %s176, 1
          %s552 = smul.addr %s551, 16
          %s553 = scalar_lea.vmem [#allocation10], %s552
          %555 = dma.done %s550, 256
        $region80: #{tpu_custom_call.1} parent=75 // pred_fallthru
          _
      $region76: #{tpu_custom_call.1} parent=5 // pred_fallthru
        _
    $region6: #{tpu_custom_call.1} parent=1 // loop_footer
      %s21 = sadd.s32 1, %s17
    $region7: #{tpu_custom_call.1} parent=1 // loop_footer_branch
      %16 = sbr.rel target = $region3
    $region8: #{tpu_custom_call.1} parent=1 // loop_exit
      _
    %556 = vsyncpa [#allocation5], 1
    %s557 = scalar_lea.sflag [#allocation5], 1
    %558 = vsyncpa %s557, 1
    %559 = vsyncpa [#allocation8], 1
    %560 = vsyncpa [#allocation6], 1
    %s561 = scalar_lea.sflag [#allocation6], 1
    %562 = vsyncpa %s561, 1

</llo_original>
